<compile_context>
chip_gen: v6e
topology: v6e:2x2x1
jax: 0.10.0
libtpu: 0.0.40
codegen_flags: <defaults>
</compile_context>

<pallas_src>
import functools

import jax
import jax.numpy as jnp
from jax.experimental import pallas as pl
from jax.experimental.pallas import tpu as pltpu

_LANE = 128                         # vreg lane width (last dim)
_SUBLANE = 8                        # vreg sublane width (second-to-last dim, fp32)
_VMEM_BUDGET = 36 * 1024 * 1024     # tiling budget, conservative across v5e/v6e/v7x
_VMEM_LIMIT = 48 * 1024 * 1024      # scoped VMEM limit handed to Mosaic


def _cdiv(a, b):
    return -(-a // b)


def _round_up(v, m):
    return ((v + m - 1) // m) * m


def _linear_kernel(x_ref, w_ref, b_ref, o_ref):
    # x_ref: (tile_n, F_in)      streamed over rows (innermost grid axis)
    # w_ref: (F_in, tile_fout)   pre-transposed weight slab (resident or streamed over j)
    # b_ref: (1, tile_fout)      broadcasts implicitly against the accumulator
    # o_ref: (tile_n, tile_fout)
    acc = jnp.dot(x_ref[...], w_ref[...], preferred_element_type=jnp.float32)  # MXU
    o_ref[...] = (acc + b_ref[...]).astype(o_ref.dtype)


def _choose_tiles(n, f_in, f_out, itemsize):
    """Pick (tile_n, tile_fout) so weight + double-buffered x/out tiles fit the budget."""
    # Output-feature slab: keep the whole weight resident when it fits comfortably,
    # otherwise stream 128-multiple slabs of the output-feature dim.
    if f_in * f_out * itemsize <= _VMEM_BUDGET // 2 or f_out <= _LANE:
        tile_fout = f_out
    else:
        tile_fout = 512
        while tile_fout > _LANE and f_in * tile_fout * itemsize > _VMEM_BUDGET // 2:
            tile_fout //= 2
    num_j = _cdiv(f_out, tile_fout)

    # Weight buffers: 1 copy when grid-invariant (Buffered(1)), 2 when streamed.
    w_buf_bytes = f_in * min(tile_fout, f_out) * itemsize * (1 if num_j == 1 else 2)
    rem = max(_VMEM_BUDGET - w_buf_bytes, 4 * 1024 * 1024)
    # 2 x-buffers of (tile_n, f_in) + 2 out-buffers of (tile_n, tile_fout).
    per_row = 2 * (f_in + min(tile_fout, f_out)) * itemsize
    tile_n = rem // per_row
    tile_n = max(_SUBLANE, min(4096, (tile_n // _SUBLANE) * _SUBLANE))
    tile_n = min(tile_n, _round_up(n, _SUBLANE))
    return int(tile_n), int(tile_fout)


def prepare_feature_adapter_params(weight, bias):
    """One-time layout prep (hoisted out of the per-call path, per review).

    weight: [F_out, F_in] (PyTorch layout); bias: [F_out].
    Returns (wt [F_in, F_out], bias2d [1, F_out]).
    """
    f_out, f_in = weight.shape
    assert bias.shape == (f_out,), "bias shape mismatch"
    wt = jnp.transpose(jnp.asarray(weight))          # [F_in, F_out]: plain MXU dot in-kernel
    b2d = jnp.asarray(bias).reshape(1, f_out)
    return wt, b2d


@functools.partial(jax.jit, static_argnames=("single_buffer_params",))
def feature_adapter_apply(x, wt, bias2d, *, single_buffer_params=True):
    """x: [..., F_in]; wt: [F_in, F_out] (pre-transposed); bias2d: [1, F_out]."""
    orig_shape = x.shape
    f_in, f_out = wt.shape
    assert orig_shape[-1] == f_in, "feature_dim mismatch"
    assert bias2d.shape == (1, f_out), "bias shape mismatch"

    x2d = x.reshape(-1, f_in)
    n = x2d.shape[0]

    tile_n, tile_fout = _choose_tiles(n, f_in, f_out, x.dtype.itemsize)
    num_i = _cdiv(n, tile_n)
    num_j = _cdiv(f_out, tile_fout)

    # Row axis innermost: each weight slab is DMA'd exactly once; the x row-tile is
    # re-fetched only when j changes (num_j is 1 in the common resident-weight case).
    grid = (num_j, num_i)

    if num_j == 1 and single_buffer_params:
        # Grid-invariant weight/bias: single-buffered to halve their VMEM footprint.
        w_spec = pl.BlockSpec((f_in, tile_fout), lambda j, i: (0, j),
                              pipeline_mode=pl.Buffered(1))
        b_spec = pl.BlockSpec((1, tile_fout), lambda j, i: (0, j),
                              pipeline_mode=pl.Buffered(1))
    else:
        w_spec = pl.BlockSpec((f_in, tile_fout), lambda j, i: (0, j))
        b_spec = pl.BlockSpec((1, tile_fout), lambda j, i: (0, j))

    out2d = pl.pallas_call(
        _linear_kernel,
        out_shape=jax.ShapeDtypeStruct((n, f_out), x.dtype),
        grid=grid,
        in_specs=[
            pl.BlockSpec((tile_n, f_in), lambda j, i: (i, 0)),   # x streams over rows
            w_spec,
            b_spec,
        ],
        out_specs=pl.BlockSpec((tile_n, tile_fout), lambda j, i: (i, j)),
        compiler_params=pltpu.CompilerParams(
            dimension_semantics=("parallel", "parallel"),  # shard across TCs (v7x megacore)
            vmem_limit_bytes=_VMEM_LIMIT,
        ),
    )(x2d, wt, bias2d)

    return out2d.reshape(*orig_shape[:-1], f_out)


def feature_adapter(x, weight, bias):
    """Convenience path: nn.Linear semantics x @ W.T + b with W = [F_out, F_in]."""
    wt, b2d = prepare_feature_adapter_params(weight, bias)
    try:
        return feature_adapter_apply(x, wt, b2d, single_buffer_params=True)
    except Exception:
        # Fallback if this JAX build rejects single-buffered (Buffered(1)) block specs.
        return feature_adapter_apply(x, wt, b2d, single_buffer_params=False)


if __name__ == "__main__":
    feature_dim = 32
    batch, seq = 2, 8  # forward accepts any [..., feature_dim]

    key = jax.random.PRNGKey(0)
    kx, kw, kb = jax.random.split(key, 3)

    # Deterministic params matching nn.Linear(feature_dim, feature_dim):
    # weight [F_out, F_in], bias [F_out], uniform(-1/sqrt(F), 1/sqrt(F)).
    bound = feature_dim ** -0.5
    weight = jax.random.uniform(kw, (feature_dim, feature_dim), jnp.float32, -bound, bound)
    bias = jax.random.uniform(kb, (feature_dim,), jnp.float32, -bound, bound)

    x = jax.random.normal(kx, (batch, seq, feature_dim), jnp.float32)

    out = feature_adapter(x, weight, bias)
    jax.block_until_ready(out)

    # Reference check in plain JAX (PyTorch nn.Linear convention: x @ W.T + b).
    ref = x @ weight.T + bias
    assert out.shape == ref.shape, "shape mismatch vs reference"
    assert jnp.allclose(out, ref, atol=1e-5, rtol=1e-5), "mismatch vs reference"

    print("KERNEL_OK")
</pallas_src>

<mosaic_0001>
module attributes {stable_mosaic.version = 11 : i64} {
  func.func @_linear_kernel(%arg0: i32, %arg1: i32, %arg2: memref<16x32xf32, #tpu.memory_space<vmem>>, %arg3: memref<32x32xf32, #tpu.memory_space<vmem>>, %arg4: memref<1x32xf32, #tpu.memory_space<vmem>>, %arg5: memref<16x32xf32, #tpu.memory_space<vmem>>) attributes {dimension_semantics = [#tpu.dimension_semantics<parallel>, #tpu.dimension_semantics<parallel>], iteration_bounds = array<i64: 1, 1>, scalar_prefetch = 0 : i64, scratch_operands = 0 : i64, tpu.core_type = #tpu.core_type<tc>, window_params = [{transform_indices = @transform_0, window_bounds = array<i64: 16, 32>}, {pipeline_mode = #tpu.pipeline_mode<synchronous>, transform_indices = @transform_1, window_bounds = array<i64: 32, 32>}, {pipeline_mode = #tpu.pipeline_mode<synchronous>, transform_indices = @transform_2, window_bounds = array<i64: 1, 32>}, {transform_indices = @transform_3, window_bounds = array<i64: 16, 32>}]} {
    %c0 = arith.constant 0 : index
    %c0_0 = arith.constant 0 : index
    %0 = vector.load %arg2[%c0, %c0_0] : memref<16x32xf32, #tpu.memory_space<vmem>>, vector<16x32xf32>
    %c0_1 = arith.constant 0 : index
    %c0_2 = arith.constant 0 : index
    %1 = vector.load %arg3[%c0_1, %c0_2] : memref<32x32xf32, #tpu.memory_space<vmem>>, vector<32x32xf32>
    %cst = arith.constant dense<0.000000e+00> : vector<16x32xf32>
    %2 = tpu.matmul %0, %1, %cst {dimension_numbers = #tpu.dot_dimension_numbers<[1], [0], [0], [1], [0, 0, 1, 1], [], []>} : vector<16x32xf32>, vector<32x32xf32>, vector<16x32xf32> -> vector<16x32xf32>
    %c0_3 = arith.constant 0 : index
    %c0_4 = arith.constant 0 : index
    %3 = vector.load %arg4[%c0_3, %c0_4] : memref<1x32xf32, #tpu.memory_space<vmem>>, vector<1x32xf32>
    %4 = vector.broadcast %3 : vector<1x32xf32> to vector<16x32xf32>
    %5 = arith.addf %2, %4 : vector<16x32xf32>
    %c0_5 = arith.constant 0 : index
    %c0_6 = arith.constant 0 : index
    %6 = vector.load %arg5[%c0_5, %c0_6] : memref<16x32xf32, #tpu.memory_space<vmem>>, vector<16x32xf32>
    tpu.vector_store %arg5[%c0_5, %c0_6], %5 {strides = array<i32>} : memref<16x32xf32, #tpu.memory_space<vmem>>, vector<16x32xf32>,
    return
  }
  func.func @transform_0(%arg0: i32, %arg1: i32) -> (i32, i32) {
    %c0_i32 = arith.constant 0 : i32
    %c0_i32_0 = arith.constant 0 : i32
    return %arg1, %c0_i32 : i32, i32
  }
  func.func @transform_1(%arg0: i32, %arg1: i32) -> (i32, i32) {
    %c0_i32 = arith.constant 0 : i32
    %c0_i32_0 = arith.constant 0 : i32
    return %c0_i32, %arg0 : i32, i32
  }
  func.func @transform_2(%arg0: i32, %arg1: i32) -> (i32, i32) {
    %c0_i32 = arith.constant 0 : i32
    %c0_i32_0 = arith.constant 0 : i32
    return %c0_i32, %arg0 : i32, i32
  }
  func.func @transform_3(%arg0: i32, %arg1: i32) -> (i32, i32) {
    %c0_i32 = arith.constant 0 : i32
    return %arg1, %arg0 : i32, i32
  }
}

module attributes {stable_mosaic.version = 11 : i64} {
  func.func @_linear_kernel(%arg0: i32, %arg1: i32, %arg2: memref<16x32xf32, #tpu.memory_space<vmem>>, %arg3: memref<32x32xf32, #tpu.memory_space<vmem>>, %arg4: memref<1x32xf32, #tpu.memory_space<vmem>>, %arg5: memref<16x32xf32, #tpu.memory_space<vmem>>) attributes {dimension_semantics = [#tpu.dimension_semantics<parallel>, #tpu.dimension_semantics<parallel>], iteration_bounds = array<i64: 1, 1>, scalar_prefetch = 0 : i64, scratch_operands = 0 : i64, tpu.core_type = #tpu.core_type<tc>, window_params = [{transform_indices = @transform_0, window_bounds = array<i64: 16, 32>}, {transform_indices = @transform_1, window_bounds = array<i64: 32, 32>}, {transform_indices = @transform_2, window_bounds = array<i64: 1, 32>}, {transform_indices = @transform_3, window_bounds = array<i64: 16, 32>}]} {
    %c0 = arith.constant 0 : index
    %c0_0 = arith.constant 0 : index
    %0 = vector.load %arg2[%c0, %c0_0] : memref<16x32xf32, #tpu.memory_space<vmem>>, vector<16x32xf32>
    %c0_1 = arith.constant 0 : index
    %c0_2 = arith.constant 0 : index
    %1 = vector.load %arg3[%c0_1, %c0_2] : memref<32x32xf32, #tpu.memory_space<vmem>>, vector<32x32xf32>
    %cst = arith.constant dense<0.000000e+00> : vector<16x32xf32>
    %2 = tpu.matmul %0, %1, %cst {dimension_numbers = #tpu.dot_dimension_numbers<[1], [0], [0], [1], [0, 0, 1, 1], [], []>} : vector<16x32xf32>, vector<32x32xf32>, vector<16x32xf32> -> vector<16x32xf32>
    %c0_3 = arith.constant 0 : index
    %c0_4 = arith.constant 0 : index
    %3 = vector.load %arg4[%c0_3, %c0_4] : memref<1x32xf32, #tpu.memory_space<vmem>>, vector<1x32xf32>
    %4 = vector.broadcast %3 : vector<1x32xf32> to vector<16x32xf32>
    %5 = arith.addf %2, %4 : vector<16x32xf32>
    %c0_5 = arith.constant 0 : index
    %c0_6 = arith.constant 0 : index
    %6 = vector.load %arg5[%c0_5, %c0_6] : memref<16x32xf32, #tpu.memory_space<vmem>>, vector<16x32xf32>
    tpu.vector_store %arg5[%c0_5, %c0_6], %5 {strides = array<i32>} : memref<16x32xf32, #tpu.memory_space<vmem>>, vector<16x32xf32>,
    return
  }
  func.func @transform_0(%arg0: i32, %arg1: i32) -> (i32, i32) {
    %c0_i32 = arith.constant 0 : i32
    %c0_i32_0 = arith.constant 0 : i32
    return %arg1, %c0_i32 : i32, i32
  }
  func.func @transform_1(%arg0: i32, %arg1: i32) -> (i32, i32) {
    %c0_i32 = arith.constant 0 : i32
    %c0_i32_0 = arith.constant 0 : i32
    return %c0_i32, %arg0 : i32, i32
  }
  func.func @transform_2(%arg0: i32, %arg1: i32) -> (i32, i32) {
    %c0_i32 = arith.constant 0 : i32
    %c0_i32_0 = arith.constant 0 : i32
    return %c0_i32, %arg0 : i32, i32
  }
  func.func @transform_3(%arg0: i32, %arg1: i32) -> (i32, i32) {
    %c0_i32 = arith.constant 0 : i32
    return %arg1, %arg0 : i32, i32
  }
}

</mosaic_0001>

<llo_original>
// kernel: feature_adapter_apply.1
$region0: #{feature_adapter_apply.1}
  #allocation0 [shape = 'u32[]', space=smem, size = 0x4, offset = 0x4, fixed_abs, tag = 'smem constant byte address 0x4 - core index']
  #allocation1 [shape = 'u32[144,128]{1,0:T(1,128)}', space=vmem, size = 0x12000, scoped, tag = 'internal scratch']
  %s0 = inlined_call_operand.hbm [shape: f32[16,32], index: 0, kind: input, shape index: {}]
  %s1 = inlined_call_operand.hbm [shape: f32[32,32], index: 1, kind: input, shape index: {}]
  %s2 = inlined_call_operand.vmem [shape: f32[1,32], index: 2, kind: input, shape index: {}]
  %s3 = inlined_call_operand.hbm [shape: f32[16,32], index: 3, kind: output, shape index: {}]
  %s4 = sld [smem:[#allocation0]]
  $region30: #{feature_adapter_apply.1} parent=0
    _
  %s6 = ssub.s32 1, %s4
  %s7 = scalar_select 0, %s6, %s4
  $region1: #{feature_adapter_apply.1} parent=0
    #allocation2 [shape = 'u8[8192]{0}', space=vmem, size = 0x2000, scoped, tag = 'input window, operand 0, single buffered']
    #allocation3 [shape = 's32[1]{0}', space=sflag, size = 0x4, scoped, tag = 'scoped memory for feature_adapter_apply.1']
    #allocation4 [shape = 's32[1]{0}', space=sflag, size = 0x4, scoped, tag = 'scoped memory for feature_adapter_apply.1']
    #allocation5 [shape = 'u8[16384]{0}', space=vmem, size = 0x4000, scoped, tag = 'input window, operand 1, single buffered']
    #allocation6 [shape = 's32[1]{0}', space=sflag, size = 0x4, scoped, tag = 'scoped memory for feature_adapter_apply.1']
    #allocation7 [shape = 'u8[8192]{0}', space=vmem, size = 0x2000, scoped, tag = 'output window, operand 0, single buffered']
    %8 = vsyncpa [#allocation3], 0
    %9 = vsyncpa [#allocation6], 0
    %10 = vsyncpa [#allocation4], 0
    // Predicated region
    $region2: #{feature_adapter_apply.1} parent=1 // pred_check
      _
    $region3: #{feature_adapter_apply.1} parent=1 // pred_check_branch
      %12 = sbr.rel (0) target = $region5
    $region4: #{feature_adapter_apply.1} parent=1 // pred_region
      %s14 = ssub.s32 256, 256
      %15 = vsyncadd [#allocation3], %s14
      %s16 = sshll.u32 [#allocation2], 4
      %s17 = int_to_ptr.vmem [resolvable:$true] %s16
      %22 = dma.hbm_to_vmem [thread:$0]  %s0, 256, %s17, [#allocation3], 128, 128, 8
    $region5: #{feature_adapter_apply.1} parent=1 // pred_fallthru
      _
    // Predicated region
    $region6: #{feature_adapter_apply.1} parent=1 // pred_check
      _
    $region7: #{feature_adapter_apply.1} parent=1 // pred_check_branch
      %24 = sbr.rel (0) target = $region9
    $region8: #{feature_adapter_apply.1} parent=1 // pred_region
      %s26 = ssub.s32 512, 512
      %27 = vsyncadd [#allocation6], %s26
      %s28 = sshll.u32 [#allocation5], 4
      %s29 = int_to_ptr.vmem [resolvable:$true] %s28
      %34 = dma.hbm_to_vmem [thread:$0]  %s1, 512, %s29, [#allocation6], 128, 128, 8
    $region9: #{feature_adapter_apply.1} parent=1 // pred_fallthru
      _
    // Predicated region
    $region10: #{feature_adapter_apply.1} parent=1 // pred_check
      _
    $region11: #{feature_adapter_apply.1} parent=1 // pred_check_branch
      %36 = sbr.rel (0) target = $region13
    $region12: #{feature_adapter_apply.1} parent=1 // pred_region
      _
    $region13: #{feature_adapter_apply.1} parent=1 // pred_fallthru
      _
    // Predicated region
    $region14: #{feature_adapter_apply.1} parent=1 // pred_check
      _
    $region15: #{feature_adapter_apply.1} parent=1 // pred_check_branch
      %38 = sbr.rel (0) target = $region17
    $region16: #{feature_adapter_apply.1} parent=1 // pred_region
      %39 = dma.done [#allocation3], 256
    $region17: #{feature_adapter_apply.1} parent=1 // pred_fallthru
      _
    // Predicated region
    $region18: #{feature_adapter_apply.1} parent=1 // pred_check
      _
    $region19: #{feature_adapter_apply.1} parent=1 // pred_check_branch
      %41 = sbr.rel (0) target = $region21
    $region20: #{feature_adapter_apply.1} parent=1 // pred_region
      %42 = dma.done [#allocation6], 512
    $region21: #{feature_adapter_apply.1} parent=1 // pred_fallthru
      _
    %v43 = vld [vmem:[#allocation2] sm:$0xff]
    %v44 = vld [vmem:[#allocation2 + $0x8] sm:$0xff]
    %v45 = vld [vmem:[#allocation5] sm:$0xff]
    %v46 = vld [vmem:[#allocation5 + $0x8] sm:$0xff]
    %v47 = vld [vmem:[#allocation5 + $0x10] sm:$0xff]
    %v48 = vld [vmem:[#allocation5 + $0x18] sm:$0xff]
    %v49 = vld [vmem:[%s2] sm:$0x1]
    %v51 = vlaneseq
    %v52 = vshrl.u32 %v51, 7
    %v53 = vsub.s32 0, %v52
    %v54 = vrot.slane %v49, %v53
    %vm56 = vcmask 261120
    %v58 = vsel %vm56, %v43, 0
    %v61 = vsel %vm56, %v44, 0
    %63 = vmatprep.subr.mxu0 0.0
    %64 = vmatpush1.msra.mxu0 0.0
    %65 = vmatprep.subr.mxu0 0.0
    %66 = vmatpush1.msra.mxu0 0.0
    %67 = vmatprep.subr.mxu0 0.0
    %68 = vmatpush1.msra.mxu0 0.0
    %69 = vmatprep.subr.mxu0 0.0
    %70 = vmatpush1.msra.mxu0 0.0
    %71 = vmatprep.subr.mxu0 0.0
    %72 = vmatpush1.msra.mxu0 0.0
    %73 = vmatprep.subr.mxu0 0.0
    %74 = vmatpush1.msra.mxu0 0.0
    %75 = vmatprep.subr.mxu0 0.0
    %76 = vmatpush1.msra.mxu0 0.0
    %77 = vmatprep.subr.mxu0 0.0
    %78 = vmatpush1.msra.mxu0 0.0
    %79 = vmatprep.subr.mxu0 0.0
    %80 = vmatpush1.msra.mxu0 0.0
    %81 = vmatprep.subr.mxu0 0.0
    %82 = vmatpush1.msra.mxu0 0.0
    %83 = vmatprep.subr.mxu0 0.0
    %84 = vmatpush1.msra.mxu0 0.0
    %85 = vmatprep.subr.mxu0 0.0
    %86 = vmatpush1.msra.mxu0 0.0
    %87 = vmatprep.subr.mxu0 0.0
    %88 = vmatpush1.msra.mxu0 %v48
    %89 = vmatprep.subr.mxu0 0.0
    %90 = vmatpush1.msra.mxu0 %v47
    %91 = vmatprep.subr.mxu0 0.0
    %92 = vmatpush1.msra.mxu0 %v46
    %93 = vmatprep.subr.mxu0 0.0
    %94 = vmatpush1.msra.mxu0 %v45
    %95 = vmatprep.subr.mxu0 0.0
    %96 = vmatpush2.msra.mxu0 0.0
    %97 = vmatprep.subr.mxu0 0.0
    %98 = vmatpush2.msra.mxu0 0.0
    %99 = vmatprep.subr.mxu0 0.0
    %100 = vmatpush2.msra.mxu0 0.0
    %101 = vmatprep.subr.mxu0 0.0
    %102 = vmatpush2.msra.mxu0 0.0
    %103 = vmatprep.subr.mxu0 0.0
    %104 = vmatpush2.msra.mxu0 0.0
    %105 = vmatprep.subr.mxu0 0.0
    %106 = vmatpush2.msra.mxu0 0.0
    %107 = vmatprep.subr.mxu0 0.0
    %108 = vmatpush2.msra.mxu0 0.0
    %109 = vmatprep.subr.mxu0 0.0
    %110 = vmatpush2.msra.mxu0 0.0
    %111 = vmatprep.subr.mxu0 0.0
    %112 = vmatpush2.msra.mxu0 0.0
    %113 = vmatprep.subr.mxu0 0.0
    %114 = vmatpush2.msra.mxu0 0.0
    %115 = vmatprep.subr.mxu0 0.0
    %116 = vmatpush2.msra.mxu0 0.0
    %117 = vmatprep.subr.mxu0 0.0
    %118 = vmatpush2.msra.mxu0 0.0
    %119 = vmatprep.subr.mxu0 0.0
    %120 = vmatpush2.msra.mxu0 0.0
    %121 = vmatprep.subr.mxu0 0.0
    %122 = vmatpush2.msra.mxu0 0.0
    %123 = vmatprep.subr.mxu0 0.0
    %124 = vmatpush2.msra.mxu0 0.0
    %125 = vmatprep.subr.mxu0 0.0
    %126 = vmatpush2.msra.mxu0 0.0
    %127 = vmatprep.mubr.f32.mxu0 0.0
    %128 = vmatmul.mubr.f32.gmra.mxu0 %v58
    %v129 = vpop.f32.mrf.mxu0
    %v130 = vadd.f32 %v54, %v129
    %v131 = vpop.f32.mrf.mxu0
    %132 = vmatprep.mubr.f32.mxu0 0.0
    %133 = vmatmul.mubr.f32.gmra.mxu0 %v61
    %v134 = vpop.f32.mrf.mxu0
    %v135 = vadd.f32 %v54, %v134
    %v136 = vpop.f32.mrf.mxu0
    %137 = vdwg.mxu0
    %138 = vst.msk [vmem:[#allocation7] sm:$0xff] %vm56, %v130
    %139 = vst.msk [vmem:[#allocation7 + $0x8] sm:$0xff] %vm56, %v135
    // Predicated region
    $region22: #{feature_adapter_apply.1} parent=1 // pred_check
      _
    $region23: #{feature_adapter_apply.1} parent=1 // pred_check_branch
      %141 = sbr.rel (0) target = $region25
    $region24: #{feature_adapter_apply.1} parent=1 // pred_region
      %s143 = ssub.s32 256, 256
      %144 = vsyncadd [#allocation4], %s143
      %s145 = sshll.u32 [#allocation7], 4
      %s146 = int_to_ptr.vmem [resolvable:$true] %s145
      %151 = dma.vmem_to_hbm [thread:$0]  %s146, 256, %s3, [#allocation4], 128, 128, 8
    $region25: #{feature_adapter_apply.1} parent=1 // pred_fallthru
      _
    // Predicated region
    $region26: #{feature_adapter_apply.1} parent=1 // pred_check
      _
    $region27: #{feature_adapter_apply.1} parent=1 // pred_check_branch
      %153 = sbr.rel (0) target = $region29
    $region28: #{feature_adapter_apply.1} parent=1 // pred_region
      %154 = dma.done [#allocation4], 256
    $region29: #{feature_adapter_apply.1} parent=1 // pred_fallthru
      _
    %155 = vsyncpa [#allocation3], 1
    %156 = vsyncpa [#allocation6], 1
    %157 = vsyncpa [#allocation4], 1

// kernel: feature_adapter_apply.1
$region0: #{feature_adapter_apply.1}
  #allocation0 [shape = 'u32[]', space=smem, size = 0x4, offset = 0x4, fixed_abs, tag = 'smem constant byte address 0x4 - core index']
  #allocation1 [shape = 'u32[144,128]{1,0:T(1,128)}', space=vmem, size = 0x12000, scoped, tag = 'internal scratch']
  %s0 = inlined_call_operand.hbm [shape: f32[16,32], index: 0, kind: input, shape index: {}]
  %s1 = inlined_call_operand.hbm [shape: f32[32,32], index: 1, kind: input, shape index: {}]
  %s2 = inlined_call_operand.vmem [shape: f32[1,32], index: 2, kind: input, shape index: {}]
  %s3 = inlined_call_operand.hbm [shape: f32[16,32], index: 3, kind: output, shape index: {}]
  %s4 = sld [smem:[#allocation0]]
  $region30: #{feature_adapter_apply.1} parent=0
    _
  %s6 = ssub.s32 1, %s4
  %s7 = scalar_select 0, %s6, %s4
  $region1: #{feature_adapter_apply.1} parent=0
    #allocation2 [shape = 'u8[8192]{0}', space=vmem, size = 0x2000, scoped, tag = 'input window, operand 0, single buffered']
    #allocation3 [shape = 's32[1]{0}', space=sflag, size = 0x4, scoped, tag = 'scoped memory for feature_adapter_apply.1']
    #allocation4 [shape = 's32[1]{0}', space=sflag, size = 0x4, scoped, tag = 'scoped memory for feature_adapter_apply.1']
    #allocation5 [shape = 'u8[16384]{0}', space=vmem, size = 0x4000, scoped, tag = 'input window, operand 1, single buffered']
    #allocation6 [shape = 's32[1]{0}', space=sflag, size = 0x4, scoped, tag = 'scoped memory for feature_adapter_apply.1']
    #allocation7 [shape = 'u8[8192]{0}', space=vmem, size = 0x2000, scoped, tag = 'output window, operand 0, single buffered']
    %8 = vsyncpa [#allocation3], 0
    %9 = vsyncpa [#allocation6], 0
    %10 = vsyncpa [#allocation4], 0
    // Predicated region
    $region2: #{feature_adapter_apply.1} parent=1 // pred_check
      _
    $region3: #{feature_adapter_apply.1} parent=1 // pred_check_branch
      %12 = sbr.rel (0) target = $region5
    $region4: #{feature_adapter_apply.1} parent=1 // pred_region
      %s14 = ssub.s32 256, 256
      %15 = vsyncadd [#allocation3], %s14
      %s16 = sshll.u32 [#allocation2], 4
      %s17 = int_to_ptr.vmem [resolvable:$true] %s16
      %22 = dma.hbm_to_vmem [thread:$0]  %s0, 256, %s17, [#allocation3], 128, 128, 8
    $region5: #{feature_adapter_apply.1} parent=1 // pred_fallthru
      _
    // Predicated region
    $region6: #{feature_adapter_apply.1} parent=1 // pred_check
      _
    $region7: #{feature_adapter_apply.1} parent=1 // pred_check_branch
      %24 = sbr.rel (0) target = $region9
    $region8: #{feature_adapter_apply.1} parent=1 // pred_region
      %s26 = ssub.s32 512, 512
      %27 = vsyncadd [#allocation6], %s26
      %s28 = sshll.u32 [#allocation5], 4
      %s29 = int_to_ptr.vmem [resolvable:$true] %s28
      %34 = dma.hbm_to_vmem [thread:$0]  %s1, 512, %s29, [#allocation6], 128, 128, 8
    $region9: #{feature_adapter_apply.1} parent=1 // pred_fallthru
      _
    // Predicated region
    $region10: #{feature_adapter_apply.1} parent=1 // pred_check
      _
    $region11: #{feature_adapter_apply.1} parent=1 // pred_check_branch
      %36 = sbr.rel (0) target = $region13
    $region12: #{feature_adapter_apply.1} parent=1 // pred_region
      _
    $region13: #{feature_adapter_apply.1} parent=1 // pred_fallthru
      _
    // Predicated region
    $region14: #{feature_adapter_apply.1} parent=1 // pred_check
      _
    $region15: #{feature_adapter_apply.1} parent=1 // pred_check_branch
      %38 = sbr.rel (0) target = $region17
    $region16: #{feature_adapter_apply.1} parent=1 // pred_region
      %39 = dma.done [#allocation3], 256
    $region17: #{feature_adapter_apply.1} parent=1 // pred_fallthru
      _
    // Predicated region
    $region18: #{feature_adapter_apply.1} parent=1 // pred_check
      _
    $region19: #{feature_adapter_apply.1} parent=1 // pred_check_branch
      %41 = sbr.rel (0) target = $region21
    $region20: #{feature_adapter_apply.1} parent=1 // pred_region
      %42 = dma.done [#allocation6], 512
    $region21: #{feature_adapter_apply.1} parent=1 // pred_fallthru
      _
    %v43 = vld [vmem:[#allocation2] sm:$0xff]
    %v44 = vld [vmem:[#allocation2 + $0x8] sm:$0xff]
    %v45 = vld [vmem:[#allocation5] sm:$0xff]
    %v46 = vld [vmem:[#allocation5 + $0x8] sm:$0xff]
    %v47 = vld [vmem:[#allocation5 + $0x10] sm:$0xff]
    %v48 = vld [vmem:[#allocation5 + $0x18] sm:$0xff]
    %v49 = vld [vmem:[%s2] sm:$0x1]
    %v51 = vlaneseq
    %v52 = vshrl.u32 %v51, 7
    %v53 = vsub.s32 0, %v52
    %v54 = vrot.slane %v49, %v53
    %vm56 = vcmask 261120
    %v58 = vsel %vm56, %v43, 0
    %v61 = vsel %vm56, %v44, 0
    %63 = vmatprep.subr.mxu0 0.0
    %64 = vmatpush1.msra.mxu0 0.0
    %65 = vmatprep.subr.mxu0 0.0
    %66 = vmatpush1.msra.mxu0 0.0
    %67 = vmatprep.subr.mxu0 0.0
    %68 = vmatpush1.msra.mxu0 0.0
    %69 = vmatprep.subr.mxu0 0.0
    %70 = vmatpush1.msra.mxu0 0.0
    %71 = vmatprep.subr.mxu0 0.0
    %72 = vmatpush1.msra.mxu0 0.0
    %73 = vmatprep.subr.mxu0 0.0
    %74 = vmatpush1.msra.mxu0 0.0
    %75 = vmatprep.subr.mxu0 0.0
    %76 = vmatpush1.msra.mxu0 0.0
    %77 = vmatprep.subr.mxu0 0.0
    %78 = vmatpush1.msra.mxu0 0.0
    %79 = vmatprep.subr.mxu0 0.0
    %80 = vmatpush1.msra.mxu0 0.0
    %81 = vmatprep.subr.mxu0 0.0
    %82 = vmatpush1.msra.mxu0 0.0
    %83 = vmatprep.subr.mxu0 0.0
    %84 = vmatpush1.msra.mxu0 0.0
    %85 = vmatprep.subr.mxu0 0.0
    %86 = vmatpush1.msra.mxu0 0.0
    %87 = vmatprep.subr.mxu0 0.0
    %88 = vmatpush1.msra.mxu0 %v48
    %89 = vmatprep.subr.mxu0 0.0
    %90 = vmatpush1.msra.mxu0 %v47
    %91 = vmatprep.subr.mxu0 0.0
    %92 = vmatpush1.msra.mxu0 %v46
    %93 = vmatprep.subr.mxu0 0.0
    %94 = vmatpush1.msra.mxu0 %v45
    %95 = vmatprep.subr.mxu0 0.0
    %96 = vmatpush2.msra.mxu0 0.0
    %97 = vmatprep.subr.mxu0 0.0
    %98 = vmatpush2.msra.mxu0 0.0
    %99 = vmatprep.subr.mxu0 0.0
    %100 = vmatpush2.msra.mxu0 0.0
    %101 = vmatprep.subr.mxu0 0.0
    %102 = vmatpush2.msra.mxu0 0.0
    %103 = vmatprep.subr.mxu0 0.0
    %104 = vmatpush2.msra.mxu0 0.0
    %105 = vmatprep.subr.mxu0 0.0
    %106 = vmatpush2.msra.mxu0 0.0
    %107 = vmatprep.subr.mxu0 0.0
    %108 = vmatpush2.msra.mxu0 0.0
    %109 = vmatprep.subr.mxu0 0.0
    %110 = vmatpush2.msra.mxu0 0.0
    %111 = vmatprep.subr.mxu0 0.0
    %112 = vmatpush2.msra.mxu0 0.0
    %113 = vmatprep.subr.mxu0 0.0
    %114 = vmatpush2.msra.mxu0 0.0
    %115 = vmatprep.subr.mxu0 0.0
    %116 = vmatpush2.msra.mxu0 0.0
    %117 = vmatprep.subr.mxu0 0.0
    %118 = vmatpush2.msra.mxu0 0.0
    %119 = vmatprep.subr.mxu0 0.0
    %120 = vmatpush2.msra.mxu0 0.0
    %121 = vmatprep.subr.mxu0 0.0
    %122 = vmatpush2.msra.mxu0 0.0
    %123 = vmatprep.subr.mxu0 0.0
    %124 = vmatpush2.msra.mxu0 0.0
    %125 = vmatprep.subr.mxu0 0.0
    %126 = vmatpush2.msra.mxu0 0.0
    %127 = vmatprep.mubr.f32.mxu0 0.0
    %128 = vmatmul.mubr.f32.gmra.mxu0 %v58
    %v129 = vpop.f32.mrf.mxu0
    %v130 = vadd.f32 %v54, %v129
    %v131 = vpop.f32.mrf.mxu0
    %132 = vmatprep.mubr.f32.mxu0 0.0
    %133 = vmatmul.mubr.f32.gmra.mxu0 %v61
    %v134 = vpop.f32.mrf.mxu0
    %v135 = vadd.f32 %v54, %v134
    %v136 = vpop.f32.mrf.mxu0
    %137 = vdwg.mxu0
    %138 = vst.msk [vmem:[#allocation7] sm:$0xff] %vm56, %v130
    %139 = vst.msk [vmem:[#allocation7 + $0x8] sm:$0xff] %vm56, %v135
    // Predicated region
    $region22: #{feature_adapter_apply.1} parent=1 // pred_check
      _
    $region23: #{feature_adapter_apply.1} parent=1 // pred_check_branch
      %141 = sbr.rel (0) target = $region25
    $region24: #{feature_adapter_apply.1} parent=1 // pred_region
      %s143 = ssub.s32 256, 256
      %144 = vsyncadd [#allocation4], %s143
      %s145 = sshll.u32 [#allocation7], 4
      %s146 = int_to_ptr.vmem [resolvable:$true] %s145
      %151 = dma.vmem_to_hbm [thread:$0]  %s146, 256, %s3, [#allocation4], 128, 128, 8
    $region25: #{feature_adapter_apply.1} parent=1 // pred_fallthru
      _
    // Predicated region
    $region26: #{feature_adapter_apply.1} parent=1 // pred_check
      _
    $region27: #{feature_adapter_apply.1} parent=1 // pred_check_branch
      %153 = sbr.rel (0) target = $region29
    $region28: #{feature_adapter_apply.1} parent=1 // pred_region
      %154 = dma.done [#allocation4], 256
    $region29: #{feature_adapter_apply.1} parent=1 // pred_fallthru
      _
    %155 = vsyncpa [#allocation3], 1
    %156 = vsyncpa [#allocation6], 1
    %157 = vsyncpa [#allocation4], 1

</llo_original>
